<compile_context>
chip_gen: v7x
topology: tpu7x:2x2x1
jax: 0.10.0
libtpu: 0.0.40
codegen_flags: <defaults>
</compile_context>

<pallas_src>
import jax
import jax.numpy as jnp
from jax.experimental import pallas as pl
from jax.experimental.pallas import tpu as pltpu

D_IN = 384
D_H = 192
D_Z = 96

# Default batch tile.  Tunable: 256-1024 is a good range on v5e/v6e/v7x; keep
# (2 * x_tile + 2 * out_tile + weights) under the scoped-VMEM default
# (16 MiB on v5e, 32 MiB on v6e/v7x).
DEFAULT_TM = 256


def _choose_tile(batch, tm_max):
    """Sublane-aligned batch tile <= tm_max, preferring >= 2 grid steps
    (v7x has 2 TensorCores; a 1-step grid leaves one idle)."""
    tm = max(8, (min(tm_max, batch) // 8) * 8)
    if batch >= 16 and pl.cdiv(batch, tm) < 2:
        tm = max(8, ((batch // 2 + 7) // 8) * 8)
        while tm > 8 and pl.cdiv(batch, tm) < 2:
            tm -= 8
    return tm


def ae_kernel(x_ref,
              w1_ref, b1_ref,
              w23_ref, b23_ref,
              w4_ref, b4_ref,
              o_ref):
    # Activations cast to bf16 for the MXU; accumulate in f32.
    x = x_ref[...].astype(jnp.bfloat16)                                   # (TM, 384)

    # encoder: Linear(384,192) + ReLU
    h = jnp.dot(x, w1_ref[...], preferred_element_type=jnp.float32) + b1_ref[...]
    h = jnp.maximum(h, 0.0)

    # fused encoder Linear(192,96) -> decoder Linear(96,192) (no nonlinearity
    # in between, so W23 = W2 @ W3 is exact) + ReLU
    h = jnp.dot(h.astype(jnp.bfloat16), w23_ref[...],
                preferred_element_type=jnp.float32) + b23_ref[...]
    h = jnp.maximum(h, 0.0)

    # decoder: Linear(192,384)
    y = jnp.dot(h.astype(jnp.bfloat16), w4_ref[...],
                preferred_element_type=jnp.float32) + b4_ref[...]

    o_ref[...] = y.astype(o_ref.dtype)


def ae_forward(x, params, *, tm=DEFAULT_TM):
    """x: (B, 384) float32. params: dict of f32 weights/biases. Returns (B, 384) f32."""
    B, D = x.shape
    assert D == D_IN

    # Host-side folding of the activation-free bottleneck pair (f32, exact).
    w23 = params["w2"] @ params["w3"]                      # (192, 192)
    b23 = params["b2"] @ params["w3"] + params["b3"]       # (1, 192)

    # Pre-cast weights to bf16 (halves weight DMA, feeds MXU bf16 path).
    w1 = params["w1"].astype(jnp.bfloat16)
    w23 = w23.astype(jnp.bfloat16)
    w4 = params["w4"].astype(jnp.bfloat16)
    b1 = params["b1"].astype(jnp.float32)
    b23 = b23.astype(jnp.float32)
    b4 = params["b4"].astype(jnp.float32)

    # Tile / pad the batch.
    tm = _choose_tile(B, tm)
    grid = pl.cdiv(B, tm)
    b_pad = grid * tm
    x_in = jnp.pad(x, ((0, b_pad - B), (0, 0))) if b_pad != B else x

    def resident(arr):
        # Constant block index across the batch grid -> array stays VMEM-resident.
        n = arr.ndim
        return pl.BlockSpec(arr.shape, lambda i, _n=n: (0,) * _n)

    weight_bytes = sum(int(a.size) * a.dtype.itemsize
                       for a in (w1, b1, w23, b23, w4, b4))
    cost = pl.CostEstimate(
        flops=2 * b_pad * (D_IN * D_H + D_H * D_H + D_H * D_IN),
        transcendentals=0,
        bytes_accessed=2 * b_pad * D_IN * 4 + weight_bytes,
    )

    out = pl.pallas_call(
        ae_kernel,
        out_shape=jax.ShapeDtypeStruct((b_pad, D_IN), jnp.float32),
        grid_spec=pltpu.PrefetchScalarGridSpec(
            num_scalar_prefetch=0,
            grid=(grid,),
            in_specs=[
                pl.BlockSpec((tm, D_IN), lambda i: (i, 0)),   # x tile
                resident(w1), resident(b1),
                resident(w23), resident(b23),
                resident(w4), resident(b4),
            ],
            out_specs=pl.BlockSpec((tm, D_IN), lambda i: (i, 0)),
        ),
        compiler_params=pltpu.CompilerParams(
            dimension_semantics=("parallel",),
        ),
        cost_estimate=cost,
    )(x_in, w1, b1, w23, b23, w4, b4)

    return out[:B] if b_pad != B else out


def init_params(key):
    """Deterministic parameter init (PyTorch-like uniform fan-in scaling).
    Weights are stored as (in_features, out_features)."""
    ks = jax.random.split(key, 8)

    def lin(kw, kb, fan_in, fan_out):
        bound = 1.0 / jnp.sqrt(fan_in)
        w = jax.random.uniform(kw, (fan_in, fan_out), jnp.float32, -bound, bound)
        b = jax.random.uniform(kb, (1, fan_out), jnp.float32, -bound, bound)
        return w, b

    w1, b1 = lin(ks[0], ks[1], D_IN, D_H)   # Linear(384, 192)
    w2, b2 = lin(ks[2], ks[3], D_H, D_Z)    # Linear(192, 96)
    w3, b3 = lin(ks[4], ks[5], D_Z, D_H)    # Linear(96, 192)
    w4, b4 = lin(ks[6], ks[7], D_H, D_IN)   # Linear(192, 384)
    return dict(w1=w1, b1=b1, w2=w2, b2=b2, w3=w3, b3=b3, w4=w4, b4=b4)


def ae_reference(x, p):
    """Pure-JAX f32 reference matching the PyTorch forward exactly."""
    h = jnp.maximum(x @ p["w1"] + p["b1"], 0.0)
    z = h @ p["w2"] + p["b2"]
    h = jnp.maximum(z @ p["w3"] + p["b3"], 0.0)
    return h @ p["w4"] + p["b4"]


if __name__ == "__main__":
    key = jax.random.PRNGKey(0)
    k_params, k_x = jax.random.split(key)

    params = init_params(k_params)
    B = 20  # small batch; exercises padding and a 2-step ("parallel") grid
    x = jax.random.normal(k_x, (B, D_IN), jnp.float32)

    out = ae_forward(x, params)
    out = jax.block_until_ready(out)

    ref = ae_reference(x, params)
    assert out.shape == (B, D_IN)
    # bf16 MXU operands + folded W2@W3 => small numerical deviation vs f32 ref.
    assert jnp.allclose(out, ref, atol=3e-2, rtol=3e-2), (
        "mismatch vs. reference, max abs err = "
        f"{float(jnp.max(jnp.abs(out - ref)))}")

    print("KERNEL_OK")
</pallas_src>

<mosaic_0001>
module attributes {stable_mosaic.version = 11 : i64} {
  func.func @ae_kernel(%arg0: i32, %arg1: memref<16x384xf32, #tpu.memory_space<vmem>>, %arg2: memref<384x192xbf16, #tpu.memory_space<vmem>>, %arg3: memref<1x192xf32, #tpu.memory_space<vmem>>, %arg4: memref<192x192xbf16, #tpu.memory_space<vmem>>, %arg5: memref<1x192xf32, #tpu.memory_space<vmem>>, %arg6: memref<192x384xbf16, #tpu.memory_space<vmem>>, %arg7: memref<1x384xf32, #tpu.memory_space<vmem>>, %arg8: memref<16x384xf32, #tpu.memory_space<vmem>>) attributes {dimension_semantics = [#tpu.dimension_semantics<parallel>], iteration_bounds = array<i64: 2>, scalar_prefetch = 0 : i64, scratch_operands = 0 : i64, tpu.core_type = #tpu.core_type<tc>, window_params = [{transform_indices = @transform_0, window_bounds = array<i64: 16, 384>}, {pipeline_mode = #tpu.pipeline_mode<synchronous>, transform_indices = @transform_1, window_bounds = array<i64: 384, 192>}, {pipeline_mode = #tpu.pipeline_mode<synchronous>, transform_indices = @transform_2, window_bounds = array<i64: 1, 192>}, {pipeline_mode = #tpu.pipeline_mode<synchronous>, transform_indices = @transform_3, window_bounds = array<i64: 192, 192>}, {pipeline_mode = #tpu.pipeline_mode<synchronous>, transform_indices = @transform_4, window_bounds = array<i64: 1, 192>}, {pipeline_mode = #tpu.pipeline_mode<synchronous>, transform_indices = @transform_5, window_bounds = array<i64: 192, 384>}, {pipeline_mode = #tpu.pipeline_mode<synchronous>, transform_indices = @transform_6, window_bounds = array<i64: 1, 384>}, {transform_indices = @transform_7, window_bounds = array<i64: 16, 384>}]} {
    %c0 = arith.constant 0 : index
    %c0_0 = arith.constant 0 : index
    %0 = vector.load %arg1[%c0, %c0_0] : memref<16x384xf32, #tpu.memory_space<vmem>>, vector<16x384xf32>
    %1 = arith.truncf %0 : vector<16x384xf32> to vector<16x384xbf16>
    %c0_1 = arith.constant 0 : index
    %c0_2 = arith.constant 0 : index
    %2 = vector.load %arg2[%c0_1, %c0_2] : memref<384x192xbf16, #tpu.memory_space<vmem>>, vector<384x192xbf16>
    %cst = arith.constant dense<0.000000e+00> : vector<16x192xf32>
    %3 = tpu.matmul %1, %2, %cst {dimension_numbers = #tpu.dot_dimension_numbers<[1], [0], [0], [1], [0, 0, 1, 1], [], []>} : vector<16x384xbf16>, vector<384x192xbf16>, vector<16x192xf32> -> vector<16x192xf32>
    %c0_3 = arith.constant 0 : index
    %c0_4 = arith.constant 0 : index
    %4 = vector.load %arg3[%c0_3, %c0_4] : memref<1x192xf32, #tpu.memory_space<vmem>>, vector<1x192xf32>
    %5 = vector.broadcast %4 : vector<1x192xf32> to vector<16x192xf32>
    %6 = arith.addf %3, %5 : vector<16x192xf32>
    %cst_5 = arith.constant 0.000000e+00 : f32
    %7 = vector.broadcast %cst_5 : f32 to vector<16x192xf32>
    %8 = arith.maximumf %6, %7 : vector<16x192xf32>
    %9 = arith.truncf %8 : vector<16x192xf32> to vector<16x192xbf16>
    %c0_6 = arith.constant 0 : index
    %c0_7 = arith.constant 0 : index
    %10 = vector.load %arg4[%c0_6, %c0_7] : memref<192x192xbf16, #tpu.memory_space<vmem>>, vector<192x192xbf16>
    %cst_8 = arith.constant dense<0.000000e+00> : vector<16x192xf32>
    %11 = tpu.matmul %9, %10, %cst_8 {dimension_numbers = #tpu.dot_dimension_numbers<[1], [0], [0], [1], [0, 0, 1, 1], [], []>} : vector<16x192xbf16>, vector<192x192xbf16>, vector<16x192xf32> -> vector<16x192xf32>
    %c0_9 = arith.constant 0 : index
    %c0_10 = arith.constant 0 : index
    %12 = vector.load %arg5[%c0_9, %c0_10] : memref<1x192xf32, #tpu.memory_space<vmem>>, vector<1x192xf32>
    %13 = vector.broadcast %12 : vector<1x192xf32> to vector<16x192xf32>
    %14 = arith.addf %11, %13 : vector<16x192xf32>
    %cst_11 = arith.constant 0.000000e+00 : f32
    %15 = vector.broadcast %cst_11 : f32 to vector<16x192xf32>
    %16 = arith.maximumf %14, %15 : vector<16x192xf32>
    %17 = arith.truncf %16 : vector<16x192xf32> to vector<16x192xbf16>
    %c0_12 = arith.constant 0 : index
    %c0_13 = arith.constant 0 : index
    %18 = vector.load %arg6[%c0_12, %c0_13] : memref<192x384xbf16, #tpu.memory_space<vmem>>, vector<192x384xbf16>
    %cst_14 = arith.constant dense<0.000000e+00> : vector<16x384xf32>
    %19 = tpu.matmul %17, %18, %cst_14 {dimension_numbers = #tpu.dot_dimension_numbers<[1], [0], [0], [1], [0, 0, 1, 1], [], []>} : vector<16x192xbf16>, vector<192x384xbf16>, vector<16x384xf32> -> vector<16x384xf32>
    %c0_15 = arith.constant 0 : index
    %c0_16 = arith.constant 0 : index
    %20 = vector.load %arg7[%c0_15, %c0_16] : memref<1x384xf32, #tpu.memory_space<vmem>>, vector<1x384xf32>
    %21 = vector.broadcast %20 : vector<1x384xf32> to vector<16x384xf32>
    %22 = arith.addf %19, %21 : vector<16x384xf32>
    %c0_17 = arith.constant 0 : index
    %c0_18 = arith.constant 0 : index
    %23 = vector.load %arg8[%c0_17, %c0_18] : memref<16x384xf32, #tpu.memory_space<vmem>>, vector<16x384xf32>
    tpu.vector_store %arg8[%c0_17, %c0_18], %22 {strides = array<i32>} : memref<16x384xf32, #tpu.memory_space<vmem>>, vector<16x384xf32>,
    return
  }
  func.func @transform_0(%arg0: i32) -> (i32, i32) {
    %c0_i32 = arith.constant 0 : i32
    %c0_i32_0 = arith.constant 0 : i32
    return %arg0, %c0_i32 : i32, i32
  }
  func.func @transform_1(%arg0: i32) -> (i32, i32) {
    %c0_i32 = arith.constant 0 : i32
    %c0_i32_0 = arith.constant 0 : i32
    %c0_i32_1 = arith.constant 0 : i32
    return %c0_i32, %c0_i32_0 : i32, i32
  }
  func.func @transform_2(%arg0: i32) -> (i32, i32) {
    %c0_i32 = arith.constant 0 : i32
    %c0_i32_0 = arith.constant 0 : i32
    %c0_i32_1 = arith.constant 0 : i32
    return %c0_i32, %c0_i32_0 : i32, i32
  }
  func.func @transform_3(%arg0: i32) -> (i32, i32) {
    %c0_i32 = arith.constant 0 : i32
    %c0_i32_0 = arith.constant 0 : i32
    %c0_i32_1 = arith.constant 0 : i32
    return %c0_i32, %c0_i32_0 : i32, i32
  }
  func.func @transform_4(%arg0: i32) -> (i32, i32) {
    %c0_i32 = arith.constant 0 : i32
    %c0_i32_0 = arith.constant 0 : i32
    %c0_i32_1 = arith.constant 0 : i32
    return %c0_i32, %c0_i32_0 : i32, i32
  }
  func.func @transform_5(%arg0: i32) -> (i32, i32) {
    %c0_i32 = arith.constant 0 : i32
    %c0_i32_0 = arith.constant 0 : i32
    %c0_i32_1 = arith.constant 0 : i32
    return %c0_i32, %c0_i32_0 : i32, i32
  }
  func.func @transform_6(%arg0: i32) -> (i32, i32) {
    %c0_i32 = arith.constant 0 : i32
    %c0_i32_0 = arith.constant 0 : i32
    %c0_i32_1 = arith.constant 0 : i32
    return %c0_i32, %c0_i32_0 : i32, i32
  }
  func.func @transform_7(%arg0: i32) -> (i32, i32) {
    %c0_i32 = arith.constant 0 : i32
    %c0_i32_0 = arith.constant 0 : i32
    return %arg0, %c0_i32 : i32, i32
  }
}

</mosaic_0001>

<llo_original>
// kernel: tpu_custom_call.1
$region0: #{tpu_custom_call.1}
  #allocation0 [shape = 'u32[]', space=smem, size = 0x4, offset = 0x4, fixed_abs, tag = 'smem constant byte address 0x4 - core index']
  #allocation1 [shape = 'u32[144,128]{1,0:T(1,128)}', space=vmem, size = 0x12000, scoped, tag = 'internal scratch']
  %s0 = inlined_call_operand.vmem [shape: f32[32,384], index: 0, kind: input, shape index: {}]
  %s1 = inlined_call_operand.vmem [shape: bf16[384,192], index: 1, kind: input, shape index: {}]
  %s2 = inlined_call_operand.vmem [shape: f32[1,192], index: 2, kind: input, shape index: {}]
  %s3 = inlined_call_operand.vmem [shape: bf16[192,192], index: 3, kind: input, shape index: {}]
  %s4 = inlined_call_operand.vmem [shape: f32[1,192], index: 4, kind: input, shape index: {}]
  %s5 = inlined_call_operand.vmem [shape: bf16[192,384], index: 5, kind: input, shape index: {}]
  %s6 = inlined_call_operand.vmem [shape: f32[1,384], index: 6, kind: input, shape index: {}]
  %s7 = inlined_call_operand.hbm [shape: f32[32,384], index: 7, kind: output, shape index: {}]
  %s8 = sld [smem:[#allocation0]]
  $region61: #{tpu_custom_call.1} parent=0
    _
  %s10 = ssub.s32 1, %s8
  %s11 = scalar_select 0, %s10, %s8
  $region1: #{tpu_custom_call.1} parent=0
    #allocation2 [shape = 'u8[49152]{0}', space=vmem, size = 0xc000, scoped, tag = 'output window, operand 0']
    #allocation3 [shape = 's32[2]{0}', space=sflag, size = 0x8, scoped, tag = 'scoped memory for tpu_custom_call.1']
    %12 = vsyncpa [#allocation3], 0
    %s13 = scalar_lea.sflag [#allocation3], 1
    %14 = vsyncpa %s13, 0
    loop: start=0, step=1, limit=4
    $region2: #{tpu_custom_call.1} parent=1 // loop_pre_header
      _
    $region3: #{tpu_custom_call.1} parent=1 // loop_header
      %s16 = sphi 0, %s20
      %p17 = scmp.ge.s32.totalorder %s16, 4
      %s26 = sphi 0, %s28
      %s29 = sphi 0, %s26
      %s30 = sphi 0, %s29
      %s46 = sphi 0, %s30
      %s50 = sphi 0, %s50
      %s52 = sphi 0, %s50
      %s53 = sphi 0, %s52
      %s67 = sphi 0, %s53
      %s71 = sphi 0, %s71
      %s73 = sphi 0, %s71
      %s74 = sphi 0, %s73
      %s88 = sphi 0, %s74
      %s92 = sphi 0, %s92
      %s94 = sphi 0, %s92
      %s95 = sphi 0, %s94
      %s109 = sphi 0, %s95
      %s113 = sphi 0, %s113
      %s115 = sphi 0, %s113
      %s116 = sphi 0, %s115
      %s130 = sphi 0, %s116
      %s134 = sphi 0, %s134
      %s136 = sphi 0, %s134
      %s137 = sphi 0, %s136
      %s151 = sphi 0, %s137
      %s155 = sphi 0, %s155
      %s157 = sphi 0, %s155
      %s158 = sphi 0, %s157
      %s172 = sphi 0, %s158
      %s178 = sphi 0, %s180
      %s181 = sphi 0, %s178
      %s182 = sphi 0, %s181
      %s198 = sphi 0, %s182
    $region4: #{tpu_custom_call.1} parent=1 // loop_header_branch
      %19 = sbr.rel (%p17) target = $region8
    $region5: #{tpu_custom_call.1} parent=1 // loop_body
      %s21 = ssub.s32 %s16, 1
      %s22 = ssub.s32 %s16, 2
      %s23 = sadd.s32 %s16, 1
      %s24 = ssub.s32 %s16, %s23
      %p25 = scmp.eq.s32.totalorder %s24, 0
      %s27 = sadd.s32 %s26, 1
      %s28 = scalar_select %p25, %s26, %s27
      %p31 = pneg %p25
      %p32 = scmp.eq.s32.totalorder %s16, 1
      %p33 = por %p31, %p32
      %p34 = scmp.ne.s32.totalorder %s26, %s29
      %p35 = scmp.eq.s32.totalorder %s16, 0
      %p36 = por %p34, %p35
      %p37 = scmp.ne.s32.totalorder %s26, %s29
      %p38 = scmp.eq.s32.totalorder %s21, 1
      %p39 = por %p37, %p38
      %p40 = scmp.ne.s32.totalorder %s29, %s30
      %p41 = scmp.eq.s32.totalorder %s21, 0
      %p42 = por %p40, %p41
      %p43 = scmp.ne.s32.totalorder %s29, %s30
      %p44 = scmp.eq.s32.totalorder %s22, 1
      %p45 = por %p43, %p44
      %p47 = scmp.ne.s32.totalorder %s30, %s46
      %p48 = scmp.eq.s32.totalorder %s22, 0
      %p49 = por %p47, %p48
      %s51 = sadd.s32 %s50, 1
      %p54 = scmp.eq.s32.totalorder %s16, 1
      %p55 = scmp.ne.s32.totalorder %s50, %s52
      %p56 = scmp.eq.s32.totalorder %s16, 0
      %p57 = por %p55, %p56
      %p58 = scmp.ne.s32.totalorder %s50, %s52
      %p59 = scmp.eq.s32.totalorder %s21, 1
      %p60 = por %p58, %p59
      %p61 = scmp.ne.s32.totalorder %s52, %s53
      %p62 = scmp.eq.s32.totalorder %s21, 0
      %p63 = por %p61, %p62
      %p64 = scmp.ne.s32.totalorder %s52, %s53
      %p65 = scmp.eq.s32.totalorder %s22, 1
      %p66 = por %p64, %p65
      %p68 = scmp.ne.s32.totalorder %s53, %s67
      %p69 = scmp.eq.s32.totalorder %s22, 0
      %p70 = por %p68, %p69
      %s72 = sadd.s32 %s71, 1
      %p75 = scmp.eq.s32.totalorder %s16, 1
      %p76 = scmp.ne.s32.totalorder %s71, %s73
      %p77 = scmp.eq.s32.totalorder %s16, 0
      %p78 = por %p76, %p77
      %p79 = scmp.ne.s32.totalorder %s71, %s73
      %p80 = scmp.eq.s32.totalorder %s21, 1
      %p81 = por %p79, %p80
      %p82 = scmp.ne.s32.totalorder %s73, %s74
      %p83 = scmp.eq.s32.totalorder %s21, 0
      %p84 = por %p82, %p83
      %p85 = scmp.ne.s32.totalorder %s73, %s74
      %p86 = scmp.eq.s32.totalorder %s22, 1
      %p87 = por %p85, %p86
      %p89 = scmp.ne.s32.totalorder %s74, %s88
      %p90 = scmp.eq.s32.totalorder %s22, 0
      %p91 = por %p89, %p90
      %s93 = sadd.s32 %s92, 1
      %p96 = scmp.eq.s32.totalorder %s16, 1
      %p97 = scmp.ne.s32.totalorder %s92, %s94
      %p98 = scmp.eq.s32.totalorder %s16, 0
      %p99 = por %p97, %p98
      %p100 = scmp.ne.s32.totalorder %s92, %s94
      %p101 = scmp.eq.s32.totalorder %s21, 1
      %p102 = por %p100, %p101
      %p103 = scmp.ne.s32.totalorder %s94, %s95
      %p104 = scmp.eq.s32.totalorder %s21, 0
      %p105 = por %p103, %p104
      %p106 = scmp.ne.s32.totalorder %s94, %s95
      %p107 = scmp.eq.s32.totalorder %s22, 1
      %p108 = por %p106, %p107
      %p110 = scmp.ne.s32.totalorder %s95, %s109
      %p111 = scmp.eq.s32.totalorder %s22, 0
      %p112 = por %p110, %p111
      %s114 = sadd.s32 %s113, 1
      %p117 = scmp.eq.s32.totalorder %s16, 1
      %p118 = scmp.ne.s32.totalorder %s113, %s115
      %p119 = scmp.eq.s32.totalorder %s16, 0
      %p120 = por %p118, %p119
      %p121 = scmp.ne.s32.totalorder %s113, %s115
      %p122 = scmp.eq.s32.totalorder %s21, 1
      %p123 = por %p121, %p122
      %p124 = scmp.ne.s32.totalorder %s115, %s116
      %p125 = scmp.eq.s32.totalorder %s21, 0
      %p126 = por %p124, %p125
      %p127 = scmp.ne.s32.totalorder %s115, %s116
      %p128 = scmp.eq.s32.totalorder %s22, 1
      %p129 = por %p127, %p128
      %p131 = scmp.ne.s32.totalorder %s116, %s130
      %p132 = scmp.eq.s32.totalorder %s22, 0
      %p133 = por %p131, %p132
      %s135 = sadd.s32 %s134, 1
      %p138 = scmp.eq.s32.totalorder %s16, 1
      %p139 = scmp.ne.s32.totalorder %s134, %s136
      %p140 = scmp.eq.s32.totalorder %s16, 0
      %p141 = por %p139, %p140
      %p142 = scmp.ne.s32.totalorder %s134, %s136
      %p143 = scmp.eq.s32.totalorder %s21, 1
      %p144 = por %p142, %p143
      %p145 = scmp.ne.s32.totalorder %s136, %s137
      %p146 = scmp.eq.s32.totalorder %s21, 0
      %p147 = por %p145, %p146
      %p148 = scmp.ne.s32.totalorder %s136, %s137
      %p149 = scmp.eq.s32.totalorder %s22, 1
      %p150 = por %p148, %p149
      %p152 = scmp.ne.s32.totalorder %s137, %s151
      %p153 = scmp.eq.s32.totalorder %s22, 0
      %p154 = por %p152, %p153
      %s156 = sadd.s32 %s155, 1
      %p159 = scmp.eq.s32.totalorder %s16, 1
      %p160 = scmp.ne.s32.totalorder %s155, %s157
      %p161 = scmp.eq.s32.totalorder %s16, 0
      %p162 = por %p160, %p161
      %p163 = scmp.ne.s32.totalorder %s155, %s157
      %p164 = scmp.eq.s32.totalorder %s21, 1
      %p165 = por %p163, %p164
      %p166 = scmp.ne.s32.totalorder %s157, %s158
      %p167 = scmp.eq.s32.totalorder %s21, 0
      %p168 = por %p166, %p167
      %p169 = scmp.ne.s32.totalorder %s157, %s158
      %p170 = scmp.eq.s32.totalorder %s22, 1
      %p171 = por %p169, %p170
      %p173 = scmp.ne.s32.totalorder %s158, %s172
      %p174 = scmp.eq.s32.totalorder %s22, 0
      %p175 = por %p173, %p174
      %s176 = ssub.s32 %s16, %s23
      %p177 = scmp.eq.s32.totalorder %s176, 0
      %s179 = sadd.s32 %s178, 1
      %s180 = scalar_select %p177, %s178, %s179
      %p183 = pneg %p177
      %p184 = scmp.eq.s32.totalorder %s16, 1
      %p185 = por %p183, %p184
      %p186 = scmp.ne.s32.totalorder %s178, %s181
      %p187 = scmp.eq.s32.totalorder %s16, 0
      %p188 = por %p186, %p187
      %p189 = scmp.ne.s32.totalorder %s178, %s181
      %p190 = scmp.eq.s32.totalorder %s21, 1
      %p191 = por %p189, %p190
      %p192 = scmp.ne.s32.totalorder %s181, %s182
      %p193 = scmp.eq.s32.totalorder %s21, 0
      %p194 = por %p192, %p193
      %p195 = scmp.ne.s32.totalorder %s181, %s182
      %p196 = scmp.eq.s32.totalorder %s22, 1
      %p197 = por %p195, %p196
      %p199 = scmp.ne.s32.totalorder %s182, %s198
      %p200 = scmp.eq.s32.totalorder %s22, 0
      %p201 = por %p199, %p200
      %p202 = scmp.le.s32.totalorder 1, %s16
      %p203 = scmp.lt.s32.totalorder %s16, 3
      %p204 = pnand %p202, %p203
      %p205 = pneg %p204
      // Predicated region
      $region9: #{tpu_custom_call.1} parent=5 // pred_check
        _
      $region10: #{tpu_custom_call.1} parent=5 // pred_check_branch
        %207 = sbr.rel (%p204) target = $region12
      $region11: #{tpu_custom_call.1} parent=5 // pred_region
        %s208 = ssub.s32 %s16, 1
        // Predicated region
        $region13: #{tpu_custom_call.1} parent=11 // pred_check
          %p209 = pneg %p63
        $region14: #{tpu_custom_call.1} parent=11 // pred_check_branch
          %211 = sbr.rel (%p209) target = $region16
        $region15: #{tpu_custom_call.1} parent=11 // pred_region
          _
        $region16: #{tpu_custom_call.1} parent=11 // pred_fallthru
          _
        // Predicated region
        $region17: #{tpu_custom_call.1} parent=11 // pred_check
          %p212 = pneg %p84
        $region18: #{tpu_custom_call.1} parent=11 // pred_check_branch
          %214 = sbr.rel (%p212) target = $region20
        $region19: #{tpu_custom_call.1} parent=11 // pred_region
          _
        $region20: #{tpu_custom_call.1} parent=11 // pred_fallthru
          _
        // Predicated region
        $region21: #{tpu_custom_call.1} parent=11 // pred_check
          %p215 = pneg %p105
        $region22: #{tpu_custom_call.1} parent=11 // pred_check_branch
          %217 = sbr.rel (%p215) target = $region24
        $region23: #{tpu_custom_call.1} parent=11 // pred_region
          _
        $region24: #{tpu_custom_call.1} parent=11 // pred_fallthru
          _
        // Predicated region
        $region25: #{tpu_custom_call.1} parent=11 // pred_check
          %p218 = pneg %p126
        $region26: #{tpu_custom_call.1} parent=11 // pred_check_branch
          %220 = sbr.rel (%p218) target = $region28
        $region27: #{tpu_custom_call.1} parent=11 // pred_region
          _
        $region28: #{tpu_custom_call.1} parent=11 // pred_fallthru
          _
        // Predicated region
        $region29: #{tpu_custom_call.1} parent=11 // pred_check
          %p221 = pneg %p147
        $region30: #{tpu_custom_call.1} parent=11 // pred_check_branch
          %223 = sbr.rel (%p221) target = $region32
        $region31: #{tpu_custom_call.1} parent=11 // pred_region
          _
        $region32: #{tpu_custom_call.1} parent=11 // pred_fallthru
          _
        // Predicated region
        $region33: #{tpu_custom_call.1} parent=11 // pred_check
          %p224 = pneg %p168
        $region34: #{tpu_custom_call.1} parent=11 // pred_check_branch
          %226 = sbr.rel (%p224) target = $region36
        $region35: #{tpu_custom_call.1} parent=11 // pred_region
          _
        $region36: #{tpu_custom_call.1} parent=11 // pred_fallthru
          _
      $region12: #{tpu_custom_call.1} parent=5 // pred_fallthru
        _
      %p227 = scmp.lt.s32.totalorder %s16, 2
      // Predicated region
      $region37: #{tpu_custom_call.1} parent=5 // pred_check
        %p228 = pneg %p227
      $region38: #{tpu_custom_call.1} parent=5 // pred_check_branch
        %230 = sbr.rel (%p228) target = $region40
      $region39: #{tpu_custom_call.1} parent=5 // pred_region
        // Predicated region
        $region41: #{tpu_custom_call.1} parent=39 // pred_check
          %p231 = pneg %p36
        $region42: #{tpu_custom_call.1} parent=39 // pred_check_branch
          %233 = sbr.rel (%p231) target = $region44
        $region43: #{tpu_custom_call.1} parent=39 // pred_region
          %s234 = smul.u32 2, %s16
          %p235 = scmp.lt.s32.totalorder %s234, 3
          %s236 = scalar_select %p235, %s234, 3
          %s237 = smul.addr %s236, 3
          %s238 = smul.addr %s237, 8
          %s239 = scalar_lea.vmem %s0, %s238
          %s240 = smul.u32 2, %s16
        $region44: #{tpu_custom_call.1} parent=39 // pred_fallthru
          _
      $region40: #{tpu_custom_call.1} parent=5 // pred_fallthru
        _
      %p241 = scmp.le.s32.totalorder 1, %s16
      %p242 = scmp.lt.s32.totalorder %s16, 3
      %p243 = pnand %p241, %p242
      %p244 = pneg %p243
      // Predicated region
      $region45: #{tpu_custom_call.1} parent=5 // pred_check
        _
      $region46: #{tpu_custom_call.1} parent=5 // pred_check_branch
        %246 = sbr.rel (%p243) target = $region48
      $region47: #{tpu_custom_call.1} parent=5 // pred_region
        %s247 = ssub.s32 %s16, 1
        %s248 = smul.u32 2, %s21
        %p249 = scmp.lt.s32.totalorder %s248, 3
        %s250 = scalar_select %p249, %s248, 3
        %s251 = smul.addr %s250, 3
        %s252 = smul.addr %s251, 8
        %s253 = scalar_lea.vmem %s0, %s252
        %p254 = pneg %p42
        %p255 = pneg %p39
        %p256 = pneg %p63
        %p257 = pneg %p60
        %p258 = pneg %p84
        %p259 = pneg %p81
        %p260 = pneg %p105
        %p261 = pneg %p102
        %p262 = pneg %p126
        %p263 = pneg %p123
        %p264 = pneg %p147
        %p265 = pneg %p144
        %p266 = pneg %p168
        %p267 = pneg %p165
        %p268 = pneg %p194
        %p269 = pneg %p191
        %s270 = sand.u32 %s181, 1
        %s271 = scalar_lea.sflag [#allocation3], %s270
        %s272 = sand.u32 %s181, 1
        %s273 = smul.addr %s272, 48
        %s274 = scalar_lea.vmem [#allocation2], %s273
        %s275 = smul.u32 2, %s21
        %p276 = scmp.lt.s32.totalorder %s275, 3
        %s277 = scalar_select %p276, %s275, 3
        %s278 = smul.addr %s277, 3
        %s279 = smul.addr %s278, 8
        %s280 = scalar_lea.vmem %s0, %s279
        %s281 = smul.u32 2, %s21
        %s282 = smul.u32 2, %s21
        %v284 = vld [vmem:[%s280] sm:$0xff]
        %v285 = vld [vmem:[%s280 + $0x8] sm:$0xff]
        %v286 = vld [vmem:[%s280 + $0x10] sm:$0xff]
        %v287 = vld [vmem:[%s280 + $0x18] sm:$0xff]
        %v288 = vld [vmem:[%s280 + $0x20] sm:$0xff]
        %v289 = vld [vmem:[%s280 + $0x28] sm:$0xff]
        %v290 = vpack.c.bf16 %v287, %v284
        %v291 = vpack.c.bf16 %v288, %v285
        %v292 = vpack.c.bf16 %v289, %v286
        %v293 = vld [vmem:[%s1] sm:$0xff]
        %v294 = vld [vmem:[%s1 + $0x8] sm:$0xff]
        %v295 = vld [vmem:[%s1 + $0x10] sm:$0xff]
        %v296 = vld [vmem:[%s1 + $0x18] sm:$0xff]
        %v297 = vld [vmem:[%s1 + $0x20] sm:$0xff]
        %v298 = vld [vmem:[%s1 + $0x28] sm:$0xff]
        %v299 = vld [vmem:[%s1 + $0x30] sm:$0xff]
        %v300 = vld [vmem:[%s1 + $0x38] sm:$0xff]
        %v301 = vld [vmem:[%s1 + $0x40] sm:$0xff]
        %v302 = vld [vmem:[%s1 + $0x48] sm:$0xff]
        %v303 = vld [vmem:[%s1 + $0x50] sm:$0xff]
        %v304 = vld [vmem:[%s1 + $0x58] sm:$0xff]
        %v305 = vld [vmem:[%s1 + $0x60] sm:$0xff]
        %v306 = vld [vmem:[%s1 + $0x68] sm:$0xff]
        %v307 = vld [vmem:[%s1 + $0x70] sm:$0xff]
        %v308 = vld [vmem:[%s1 + $0x78] sm:$0xff]
        %v309 = vld [vmem:[%s1 + $0x80] sm:$0xff]
        %v310 = vld [vmem:[%s1 + $0x88] sm:$0xff]
        %v311 = vld [vmem:[%s1 + $0x90] sm:$0xff]
        %v312 = vld [vmem:[%s1 + $0x98] sm:$0xff]
        %v313 = vld [vmem:[%s1 + $0xa0] sm:$0xff]
        %v314 = vld [vmem:[%s1 + $0xa8] sm:$0xff]
        %v315 = vld [vmem:[%s1 + $0xb0] sm:$0xff]
        %v316 = vld [vmem:[%s1 + $0xb8] sm:$0xff]
        %v317 = vld [vmem:[%s1 + $0xc0] sm:$0xff]
        %v318 = vld [vmem:[%s1 + $0xc8] sm:$0xff]
        %v319 = vld [vmem:[%s1 + $0xd0] sm:$0xff]
        %v320 = vld [vmem:[%s1 + $0xd8] sm:$0xff]
        %v321 = vld [vmem:[%s1 + $0xe0] sm:$0xff]
        %v322 = vld [vmem:[%s1 + $0xe8] sm:$0xff]
        %v323 = vld [vmem:[%s1 + $0xf0] sm:$0xff]
        %v324 = vld [vmem:[%s1 + $0xf8] sm:$0xff]
        %v325 = vld [vmem:[%s1 + $0x100] sm:$0xff]
        %v326 = vld [vmem:[%s1 + $0x108] sm:$0xff]
        %v327 = vld [vmem:[%s1 + $0x110] sm:$0xff]
        %v328 = vld [vmem:[%s1 + $0x118] sm:$0xff]
        %v329 = vld [vmem:[%s1 + $0x120] sm:$0xff]
        %v330 = vld [vmem:[%s1 + $0x128] sm:$0xff]
        %v331 = vld [vmem:[%s1 + $0x130] sm:$0xff]
        %v332 = vld [vmem:[%s1 + $0x138] sm:$0xff]
        %v333 = vld [vmem:[%s1 + $0x140] sm:$0xff]
        %v334 = vld [vmem:[%s1 + $0x148] sm:$0xff]
        %v335 = vld [vmem:[%s1 + $0x150] sm:$0xff]
        %v336 = vld [vmem:[%s1 + $0x158] sm:$0xff]
        %v337 = vld [vmem:[%s1 + $0x160] sm:$0xff]
        %v338 = vld [vmem:[%s1 + $0x168] sm:$0xff]
        %v339 = vld [vmem:[%s1 + $0x170] sm:$0xff]
        %v340 = vld [vmem:[%s1 + $0x178] sm:$0xff]
        %v341 = vld [vmem:[%s2] sm:$0x3]
        %v343 = vlaneseq
        %v344 = vshrl.u32 %v343, 7
        %v345 = vsub.s32 0, %v344
        %v346 = vrot.slane %v341, %v345
        %v347 = vlaneseq
        %v348 = vshrl.u32 %v347, 7
        %v349 = vsub.s32 1, %v348
        %v350 = vrot.slane %v341, %v349
        %v401 = vunpack.c.l.b16 %v293
        %v402 = vunpack.c.h.b16 %v293
        %v403 = vunpack.c.l.b16 %v294
        %v404 = vunpack.c.h.b16 %v294
        %v405 = vunpack.c.l.b16 %v295
        %v406 = vunpack.c.h.b16 %v295
        %v407 = vunpack.c.l.b16 %v296
        %v408 = vunpack.c.h.b16 %v296
        %v409 = vunpack.c.l.b16 %v297
        %v410 = vunpack.c.h.b16 %v297
        %v411 = vunpack.c.l.b16 %v298
        %v412 = vunpack.c.h.b16 %v298
        %v413 = vunpack.c.l.b16 %v299
        %v414 = vunpack.c.h.b16 %v299
        %v415 = vunpack.c.l.b16 %v300
        %v416 = vunpack.c.h.b16 %v300
        %v417 = vunpack.c.l.b16 %v301
        %v418 = vunpack.c.h.b16 %v301
        %v419 = vunpack.c.l.b16 %v302
        %v420 = vunpack.c.h.b16 %v302
        %v421 = vunpack.c.l.b16 %v303
        %v422 = vunpack.c.h.b16 %v303
        %v423 = vunpack.c.l.b16 %v304
        %v424 = vunpack.c.h.b16 %v304
        %v425 = vunpack.c.l.b16 %v305
        %v426 = vunpack.c.h.b16 %v305
        %v427 = vunpack.c.l.b16 %v306
        %v428 = vunpack.c.h.b16 %v306
        %v429 = vunpack.c.l.b16 %v307
        %v430 = vunpack.c.h.b16 %v307
        %v431 = vunpack.c.l.b16 %v308
        %v432 = vunpack.c.h.b16 %v308
        %v433 = vunpack.c.l.b16 %v309
        %v434 = vunpack.c.h.b16 %v309
        %v435 = vunpack.c.l.b16 %v310
        %v436 = vunpack.c.h.b16 %v310
        %v437 = vunpack.c.l.b16 %v311
        %v438 = vunpack.c.h.b16 %v311
        %v439 = vunpack.c.l.b16 %v312
        %v440 = vunpack.c.h.b16 %v312
        %v441 = vunpack.c.l.b16 %v313
        %v442 = vunpack.c.h.b16 %v313
        %v443 = vunpack.c.l.b16 %v314
        %v444 = vunpack.c.h.b16 %v314
        %v445 = vunpack.c.l.b16 %v315
        %v446 = vunpack.c.h.b16 %v315
        %v447 = vunpack.c.l.b16 %v316
        %v448 = vunpack.c.h.b16 %v316
        %v449 = vunpack.c.l.b16 %v317
        %v450 = vunpack.c.h.b16 %v317
        %v451 = vunpack.c.l.b16 %v318
        %v452 = vunpack.c.h.b16 %v318
        %v453 = vunpack.c.l.b16 %v319
        %v454 = vunpack.c.h.b16 %v319
        %v455 = vunpack.c.l.b16 %v320
        %v456 = vunpack.c.h.b16 %v320
        %v457 = vunpack.c.l.b16 %v321
        %v458 = vunpack.c.h.b16 %v321
        %v459 = vunpack.c.l.b16 %v322
        %v460 = vunpack.c.h.b16 %v322
        %v461 = vunpack.c.l.b16 %v323
        %v462 = vunpack.c.h.b16 %v323
        %v463 = vunpack.c.l.b16 %v324
        %v464 = vunpack.c.h.b16 %v324
        %v465 = vunpack.c.l.b16 %v325
        %v466 = vunpack.c.h.b16 %v325
        %v467 = vunpack.c.l.b16 %v326
        %v468 = vunpack.c.h.b16 %v326
        %v469 = vunpack.c.l.b16 %v327
        %v470 = vunpack.c.h.b16 %v327
        %v471 = vunpack.c.l.b16 %v328
        %v472 = vunpack.c.h.b16 %v328
        %v473 = vunpack.c.l.b16 %v329
        %v474 = vunpack.c.h.b16 %v329
        %v475 = vunpack.c.l.b16 %v330
        %v476 = vunpack.c.h.b16 %v330
        %v477 = vunpack.c.l.b16 %v331
        %v478 = vunpack.c.h.b16 %v331
        %v479 = vunpack.c.l.b16 %v332
        %v480 = vunpack.c.h.b16 %v332
        %v481 = vunpack.c.l.b16 %v333
        %v482 = vunpack.c.h.b16 %v333
        %v483 = vunpack.c.l.b16 %v334
        %v484 = vunpack.c.h.b16 %v334
        %v485 = vunpack.c.l.b16 %v335
        %v486 = vunpack.c.h.b16 %v335
        %v487 = vunpack.c.l.b16 %v336
        %v488 = vunpack.c.h.b16 %v336
        %v489 = vunpack.c.l.b16 %v337
        %v490 = vunpack.c.h.b16 %v337
        %v491 = vunpack.c.l.b16 %v338
        %v492 = vunpack.c.h.b16 %v338
        %v493 = vunpack.c.l.b16 %v339
        %v494 = vunpack.c.h.b16 %v339
        %v495 = vunpack.c.l.b16 %v340
        %v496 = vunpack.c.h.b16 %v340
        %v497 = vpack.c.b16 %v403, %v401
        %v498 = vpack.c.b16 %v404, %v402
        %v499 = vpack.c.b16 %v407, %v405
        %v500 = vpack.c.b16 %v408, %v406
        %v501 = vpack.c.b16 %v411, %v409
        %v502 = vpack.c.b16 %v412, %v410
        %v503 = vpack.c.b16 %v415, %v413
        %v504 = vpack.c.b16 %v416, %v414
        %v505 = vpack.c.b16 %v419, %v417
        %v506 = vpack.c.b16 %v420, %v418
        %v507 = vpack.c.b16 %v423, %v421
        %v508 = vpack.c.b16 %v424, %v422
        %v509 = vpack.c.b16 %v427, %v425
        %v510 = vpack.c.b16 %v428, %v426
        %v511 = vpack.c.b16 %v431, %v429
        %v512 = vpack.c.b16 %v432, %v430
        %v513 = vpack.c.b16 %v435, %v433
        %v514 = vpack.c.b16 %v436, %v434
        %v515 = vpack.c.b16 %v439, %v437
        %v516 = vpack.c.b16 %v440, %v438
        %v517 = vpack.c.b16 %v443, %v441
        %v518 = vpack.c.b16 %v444, %v442
        %v519 = vpack.c.b16 %v447, %v445
        %v520 = vpack.c.b16 %v448, %v446
        %v521 = vpack.c.b16 %v451, %v449
        %v522 = vpack.c.b16 %v452, %v450
        %v523 = vpack.c.b16 %v455, %v453
        %v524 = vpack.c.b16 %v456, %v454
        %v525 = vpack.c.b16 %v459, %v457
        %v526 = vpack.c.b16 %v460, %v458
        %v527 = vpack.c.b16 %v463, %v461
        %v528 = vpack.c.b16 %v464, %v462
        %v529 = vpack.c.b16 %v467, %v465
        %v530 = vpack.c.b16 %v468, %v466
        %v531 = vpack.c.b16 %v471, %v469
        %v532 = vpack.c.b16 %v472, %v470
        %v533 = vpack.c.b16 %v475, %v473
        %v534 = vpack.c.b16 %v476, %v474
        %v535 = vpack.c.b16 %v479, %v477
        %v536 = vpack.c.b16 %v480, %v478
        %v537 = vpack.c.b16 %v483, %v481
        %v538 = vpack.c.b16 %v484, %v482
        %v539 = vpack.c.b16 %v487, %v485
        %v540 = vpack.c.b16 %v488, %v486
        %v541 = vpack.c.b16 %v491, %v489
        %v542 = vpack.c.b16 %v492, %v490
        %v543 = vpack.c.b16 %v495, %v493
        %v544 = vpack.c.b16 %v496, %v494
        %593 = vmatprep.subr.bf16.mxu0 %v498
        %594 = vmatpush1.bf16.msra.mxu0 %v497
        %595 = vmatprep.subr.bf16.mxu0 %v500
        %596 = vmatpush1.bf16.msra.mxu0 %v499
        %597 = vmatprep.subr.bf16.mxu0 %v502
        %598 = vmatpush1.bf16.msra.mxu0 %v501
        %599 = vmatprep.subr.bf16.mxu0 %v504
        %600 = vmatpush1.bf16.msra.mxu0 %v503
        %601 = vmatprep.subr.bf16.mxu0 %v506
        %602 = vmatpush1.bf16.msra.mxu0 %v505
        %603 = vmatprep.subr.bf16.mxu0 %v508
        %604 = vmatpush1.bf16.msra.mxu0 %v507
        %605 = vmatprep.subr.bf16.mxu0 %v510
        %606 = vmatpush1.bf16.msra.mxu0 %v509
        %607 = vmatprep.subr.bf16.mxu0 %v512
        %608 = vmatpush1.bf16.msra.mxu0 %v511
        %609 = vmatprep.subr.bf16.mxu0 %v514
        %610 = vmatpush1.bf16.msra.mxu0 %v513
        %611 = vmatprep.subr.bf16.mxu0 %v516
        %612 = vmatpush1.bf16.msra.mxu0 %v515
        %613 = vmatprep.subr.bf16.mxu0 %v518
        %614 = vmatpush1.bf16.msra.mxu0 %v517
        %615 = vmatprep.subr.bf16.mxu0 %v520
        %616 = vmatpush1.bf16.msra.mxu0 %v519
        %617 = vmatprep.subr.bf16.mxu0 %v522
        %618 = vmatpush1.bf16.msra.mxu0 %v521
        %619 = vmatprep.subr.bf16.mxu0 %v524
        %620 = vmatpush1.bf16.msra.mxu0 %v523
        %621 = vmatprep.subr.bf16.mxu0 %v526
        %622 = vmatpush1.bf16.msra.mxu0 %v525
        %623 = vmatprep.subr.bf16.mxu0 %v528
        %624 = vmatpush1.bf16.msra.mxu0 %v527
        %625 = vmatprep.mubr.bf16.mxu0 %v291
        %626 = vmatmul.mubr.bf16.gmra.mrb[0].mxu0 %v290
        %v627 = vpop.f32.mrb[0].mxu0
        %v628 = vadd.f32 %v346, %v627
        %v629 = vpop.f32.mrb[0].mxu0
        %v630 = vadd.f32 %v350, %v629
        %v631 = vpop.f32.mrb[0].mxu0
        %v632 = vadd.f32 %v346, %v631
        %v633 = vpop.f32.mrb[0].mxu0
        %v634 = vadd.f32 %v350, %v633
        %635 = vdwg.mxu0
        %636 = vmatprep.subr.bf16.mxu0 %v530
        %637 = vmatpush1.bf16.msra.mxu0 %v529
        %638 = vmatprep.subr.bf16.mxu0 %v532
        %639 = vmatpush1.bf16.msra.mxu0 %v531
        %640 = vmatprep.subr.bf16.mxu0 %v534
        %641 = vmatpush1.bf16.msra.mxu0 %v533
        %642 = vmatprep.subr.bf16.mxu0 %v536
        %643 = vmatpush1.bf16.msra.mxu0 %v535
        %644 = vmatprep.subr.bf16.mxu0 %v538
        %645 = vmatpush1.bf16.msra.mxu0 %v537
        %646 = vmatprep.subr.bf16.mxu0 %v540
        %647 = vmatpush1.bf16.msra.mxu0 %v539
        %648 = vmatprep.subr.bf16.mxu0 %v542
        %649 = vmatpush1.bf16.msra.mxu0 %v541
        %650 = vmatprep.subr.bf16.mxu0 %v544
        %651 = vmatpush1.bf16.msra.mxu0 %v543
        %652 = vmatprep.subr.bf16.mxu0 0
        %653 = vmatpush1.bf16.msra.mxu0 0
        %654 = vmatprep.subr.bf16.mxu0 0
        %655 = vmatpush1.bf16.msra.mxu0 0
        %656 = vmatprep.subr.bf16.mxu0 0
        %657 = vmatpush1.bf16.msra.mxu0 0
        %658 = vmatprep.subr.bf16.mxu0 0
        %659 = vmatpush1.bf16.msra.mxu0 0
        %660 = vmatprep.subr.bf16.mxu0 0
        %661 = vmatpush1.bf16.msra.mxu0 0
        %662 = vmatprep.subr.bf16.mxu0 0
        %663 = vmatpush1.bf16.msra.mxu0 0
        %664 = vmatprep.subr.bf16.mxu0 0
        %665 = vmatpush1.bf16.msra.mxu0 0
        %666 = vmatprep.subr.bf16.mxu0 0
        %667 = vmatpush1.bf16.msra.mxu0 0
        %668 = vmatprep.mubr.bf16.mxu0 0
        %669 = vmatmul.mubr.bf16.gmra.mrb[0].mxu0 %v292
        %v670 = vpop.f32.mrb[0].mxu0
        %v671 = vadd.f32 %v628, %v670
        %v672 = vpop.f32.mrb[0].mxu0
        %v673 = vadd.f32 %v630, %v672
        %v674 = vpop.f32.mrb[0].mxu0
        %v675 = vadd.f32 %v632, %v674
        %v676 = vpop.f32.mrb[0].mxu0
        %v677 = vadd.f32 %v634, %v676
        %678 = vdwg.mxu0
        %v679 = vmax.f32 %v671, 0.0
        %v680 = vmax.f32 %v673, 0.0
        %v681 = vmax.f32 %v675, 0.0
        %v682 = vmax.f32 %v677, 0.0
        %v683 = vpack.c.bf16 %v681, %v679
        %v684 = vpack.c.bf16 %v682, %v680
        %v685 = vld [vmem:[%s3] sm:$0xff]
        %v686 = vld [vmem:[%s3 + $0x8] sm:$0xff]
        %v687 = vld [vmem:[%s3 + $0x10] sm:$0xff]
        %v688 = vld [vmem:[%s3 + $0x18] sm:$0xff]
        %v689 = vld [vmem:[%s3 + $0x20] sm:$0xff]
        %v690 = vld [vmem:[%s3 + $0x28] sm:$0xff]
        %v691 = vld [vmem:[%s3 + $0x30] sm:$0xff]
        %v692 = vld [vmem:[%s3 + $0x38] sm:$0xff]
        %v693 = vld [vmem:[%s3 + $0x40] sm:$0xff]
        %v694 = vld [vmem:[%s3 + $0x48] sm:$0xff]
        %v695 = vld [vmem:[%s3 + $0x50] sm:$0xff]
        %v696 = vld [vmem:[%s3 + $0x58] sm:$0xff]
        %v697 = vld [vmem:[%s3 + $0x60] sm:$0xff]
        %v698 = vld [vmem:[%s3 + $0x68] sm:$0xff]
        %v699 = vld [vmem:[%s3 + $0x70] sm:$0xff]
        %v700 = vld [vmem:[%s3 + $0x78] sm:$0xff]
        %v701 = vld [vmem:[%s3 + $0x80] sm:$0xff]
        %v702 = vld [vmem:[%s3 + $0x88] sm:$0xff]
        %v703 = vld [vmem:[%s3 + $0x90] sm:$0xff]
        %v704 = vld [vmem:[%s3 + $0x98] sm:$0xff]
        %v705 = vld [vmem:[%s3 + $0xa0] sm:$0xff]
        %v706 = vld [vmem:[%s3 + $0xa8] sm:$0xff]
        %v707 = vld [vmem:[%s3 + $0xb0] sm:$0xff]
        %v708 = vld [vmem:[%s3 + $0xb8] sm:$0xff]
        %v709 = vld [vmem:[%s4] sm:$0x3]
        %v711 = vlaneseq
        %v712 = vshrl.u32 %v711, 7
        %v713 = vsub.s32 0, %v712
        %v714 = vrot.slane %v709, %v713
        %v715 = vlaneseq
        %v716 = vshrl.u32 %v715, 7
        %v717 = vsub.s32 1, %v716
        %v718 = vrot.slane %v709, %v717
        %v745 = vunpack.c.l.b16 %v685
        %v746 = vunpack.c.h.b16 %v685
        %v747 = vunpack.c.l.b16 %v686
        %v748 = vunpack.c.h.b16 %v686
        %v749 = vunpack.c.l.b16 %v687
        %v750 = vunpack.c.h.b16 %v687
        %v751 = vunpack.c.l.b16 %v688
        %v752 = vunpack.c.h.b16 %v688
        %v753 = vunpack.c.l.b16 %v689
        %v754 = vunpack.c.h.b16 %v689
        %v755 = vunpack.c.l.b16 %v690
        %v756 = vunpack.c.h.b16 %v690
        %v757 = vunpack.c.l.b16 %v691
        %v758 = vunpack.c.h.b16 %v691
        %v759 = vunpack.c.l.b16 %v692
        %v760 = vunpack.c.h.b16 %v692
        %v761 = vunpack.c.l.b16 %v693
        %v762 = vunpack.c.h.b16 %v693
        %v763 = vunpack.c.l.b16 %v694
        %v764 = vunpack.c.h.b16 %v694
        %v765 = vunpack.c.l.b16 %v695
        %v766 = vunpack.c.h.b16 %v695
        %v767 = vunpack.c.l.b16 %v696
        %v768 = vunpack.c.h.b16 %v696
        %v769 = vunpack.c.l.b16 %v697
        %v770 = vunpack.c.h.b16 %v697
        %v771 = vunpack.c.l.b16 %v698
        %v772 = vunpack.c.h.b16 %v698
        %v773 = vunpack.c.l.b16 %v699
        %v774 = vunpack.c.h.b16 %v699
        %v775 = vunpack.c.l.b16 %v700
        %v776 = vunpack.c.h.b16 %v700
        %v777 = vunpack.c.l.b16 %v701
        %v778 = vunpack.c.h.b16 %v701
        %v779 = vunpack.c.l.b16 %v702
        %v780 = vunpack.c.h.b16 %v702
        %v781 = vunpack.c.l.b16 %v703
        %v782 = vunpack.c.h.b16 %v703
        %v783 = vunpack.c.l.b16 %v704
        %v784 = vunpack.c.h.b16 %v704
        %v785 = vunpack.c.l.b16 %v705
        %v786 = vunpack.c.h.b16 %v705
        %v787 = vunpack.c.l.b16 %v706
        %v788 = vunpack.c.h.b16 %v706
        %v789 = vunpack.c.l.b16 %v707
        %v790 = vunpack.c.h.b16 %v707
        %v791 = vunpack.c.l.b16 %v708
        %v792 = vunpack.c.h.b16 %v708
        %v793 = vpack.c.b16 %v747, %v745
        %v794 = vpack.c.b16 %v748, %v746
        %v795 = vpack.c.b16 %v751, %v749
        %v796 = vpack.c.b16 %v752, %v750
        %v797 = vpack.c.b16 %v755, %v753
        %v798 = vpack.c.b16 %v756, %v754
        %v799 = vpack.c.b16 %v759, %v757
        %v800 = vpack.c.b16 %v760, %v758
        %v801 = vpack.c.b16 %v763, %v761
        %v802 = vpack.c.b16 %v764, %v762
        %v803 = vpack.c.b16 %v767, %v765
        %v804 = vpack.c.b16 %v768, %v766
        %v805 = vpack.c.b16 %v771, %v769
        %v806 = vpack.c.b16 %v772, %v770
        %v807 = vpack.c.b16 %v775, %v773
        %v808 = vpack.c.b16 %v776, %v774
        %v809 = vpack.c.b16 %v779, %v777
        %v810 = vpack.c.b16 %v780, %v778
        %v811 = vpack.c.b16 %v783, %v781
        %v812 = vpack.c.b16 %v784, %v782
        %v813 = vpack.c.b16 %v787, %v785
        %v814 = vpack.c.b16 %v788, %v786
        %v815 = vpack.c.b16 %v791, %v789
        %v816 = vpack.c.b16 %v792, %v790
        %vm841 = vcmask 523264
        %v843 = vsel %vm841, %v684, 0
        %845 = vmatprep.subr.bf16.mxu0 %v794
        %846 = vmatpush1.bf16.msra.mxu0 %v793
        %847 = vmatprep.subr.bf16.mxu0 %v796
        %848 = vmatpush1.bf16.msra.mxu0 %v795
        %849 = vmatprep.subr.bf16.mxu0 %v798
        %850 = vmatpush1.bf16.msra.mxu0 %v797
        %851 = vmatprep.subr.bf16.mxu0 %v800
        %852 = vmatpush1.bf16.msra.mxu0 %v799
        %853 = vmatprep.subr.bf16.mxu0 %v802
        %854 = vmatpush1.bf16.msra.mxu0 %v801
        %855 = vmatprep.subr.bf16.mxu0 %v804
        %856 = vmatpush1.bf16.msra.mxu0 %v803
        %857 = vmatprep.subr.bf16.mxu0 %v806
        %858 = vmatpush1.bf16.msra.mxu0 %v805
        %859 = vmatprep.subr.bf16.mxu0 %v808
        %860 = vmatpush1.bf16.msra.mxu0 %v807
        %861 = vmatprep.subr.bf16.mxu0 %v810
        %862 = vmatpush1.bf16.msra.mxu0 %v809
        %863 = vmatprep.subr.bf16.mxu0 %v812
        %864 = vmatpush1.bf16.msra.mxu0 %v811
        %865 = vmatprep.subr.bf16.mxu0 %v814
        %866 = vmatpush1.bf16.msra.mxu0 %v813
        %867 = vmatprep.subr.bf16.mxu0 %v816
        %868 = vmatpush1.bf16.msra.mxu0 %v815
        %869 = vmatprep.subr.bf16.mxu0 0
        %870 = vmatpush1.bf16.msra.mxu0 0
        %871 = vmatprep.subr.bf16.mxu0 0
        %872 = vmatpush1.bf16.msra.mxu0 0
        %873 = vmatprep.subr.bf16.mxu0 0
        %874 = vmatpush1.bf16.msra.mxu0 0
        %875 = vmatprep.subr.bf16.mxu0 0
        %876 = vmatpush1.bf16.msra.mxu0 0
        %877 = vmatprep.mubr.bf16.mxu0 %v843
        %878 = vmatmul.mubr.bf16.gmra.mrb[0].mxu0 %v683
        %v879 = vpop.f32.mrb[0].mxu0
        %v880 = vadd.f32 %v714, %v879
        %v881 = vpop.f32.mrb[0].mxu0
        %v882 = vadd.f32 %v718, %v881
        %v883 = vpop.f32.mrb[0].mxu0
        %v884 = vadd.f32 %v714, %v883
        %v885 = vpop.f32.mrb[0].mxu0
        %v886 = vadd.f32 %v718, %v885
        %887 = vdwg.mxu0
        %v888 = vmax.f32 %v880, 0.0
        %v889 = vmax.f32 %v882, 0.0
        %v890 = vmax.f32 %v884, 0.0
        %v891 = vmax.f32 %v886, 0.0
        %v892 = vpack.c.bf16 %v890, %v888
        %v893 = vpack.c.bf16 %v891, %v889
        %v894 = vld [vmem:[%s5] sm:$0xff]
        %v895 = vld [vmem:[%s5 + $0x8] sm:$0xf]
        %v896 = vld [vmem:[%s5 + $0xc] sm:$0xff]
        %v897 = vld [vmem:[%s5 + $0x14] sm:$0xf]
        %v898 = vld [vmem:[%s5 + $0x18] sm:$0xff]
        %v899 = vld [vmem:[%s5 + $0x20] sm:$0xf]
        %v900 = vld [vmem:[%s5 + $0x24] sm:$0xff]
        %v901 = vld [vmem:[%s5 + $0x2c] sm:$0xf]
        %v902 = vld [vmem:[%s5 + $0x30] sm:$0xff]
        %v903 = vld [vmem:[%s5 + $0x38] sm:$0xf]
        %v904 = vld [vmem:[%s5 + $0x3c] sm:$0xff]
        %v905 = vld [vmem:[%s5 + $0x44] sm:$0xf]
        %v906 = vld [vmem:[%s5 + $0x48] sm:$0xff]
        %v907 = vld [vmem:[%s5 + $0x50] sm:$0xf]
        %v908 = vld [vmem:[%s5 + $0x54] sm:$0xff]
        %v909 = vld [vmem:[%s5 + $0x5c] sm:$0xf]
        %v910 = vld [vmem:[%s5 + $0x60] sm:$0xff]
        %v911 = vld [vmem:[%s5 + $0x68] sm:$0xf]
        %v912 = vld [vmem:[%s5 + $0x6c] sm:$0xff]
        %v913 = vld [vmem:[%s5 + $0x74] sm:$0xf]
        %v914 = vld [vmem:[%s5 + $0x78] sm:$0xff]
        %v915 = vld [vmem:[%s5 + $0x80] sm:$0xf]
        %v916 = vld [vmem:[%s5 + $0x84] sm:$0xff]
        %v917 = vld [vmem:[%s5 + $0x8c] sm:$0xf]
        %v918 = vld [vmem:[%s5 + $0x90] sm:$0xff]
        %v919 = vld [vmem:[%s5 + $0x98] sm:$0xf]
        %v920 = vld [vmem:[%s5 + $0x9c] sm:$0xff]
        %v921 = vld [vmem:[%s5 + $0xa4] sm:$0xf]
        %v922 = vld [vmem:[%s5 + $0xa8] sm:$0xff]
        %v923 = vld [vmem:[%s5 + $0xb0] sm:$0xf]
        %v924 = vld [vmem:[%s5 + $0xb4] sm:$0xff]
        %v925 = vld [vmem:[%s5 + $0xbc] sm:$0xf]
        %v926 = vld [vmem:[%s5 + $0xc0] sm:$0xff]
        %v927 = vld [vmem:[%s5 + $0xc8] sm:$0xf]
        %v928 = vld [vmem:[%s5 + $0xcc] sm:$0xff]
        %v929 = vld [vmem:[%s5 + $0xd4] sm:$0xf]
        %v930 = vld [vmem:[%s5 + $0xd8] sm:$0xff]
        %v931 = vld [vmem:[%s5 + $0xe0] sm:$0xf]
        %v932 = vld [vmem:[%s5 + $0xe4] sm:$0xff]
        %v933 = vld [vmem:[%s5 + $0xec] sm:$0xf]
        %v934 = vld [vmem:[%s5 + $0xf0] sm:$0xff]
        %v935 = vld [vmem:[%s5 + $0xf8] sm:$0xf]
        %v936 = vld [vmem:[%s5 + $0xfc] sm:$0xff]
        %v937 = vld [vmem:[%s5 + $0x104] sm:$0xf]
        %v938 = vld [vmem:[%s5 + $0x108] sm:$0xff]
        %v939 = vld [vmem:[%s5 + $0x110] sm:$0xf]
        %v940 = vld [vmem:[%s5 + $0x114] sm:$0xff]
        %v941 = vld [vmem:[%s5 + $0x11c] sm:$0xf]
        %v942 = vld [vmem:[%s6] sm:$0x7]
        %v944 = vlaneseq
        %v945 = vshrl.u32 %v944, 7
        %v946 = vsub.s32 0, %v945
        %v947 = vrot.slane %v942, %v946
        %v948 = vlaneseq
        %v949 = vshrl.u32 %v948, 7
        %v950 = vsub.s32 1, %v949
        %v951 = vrot.slane %v942, %v950
        %v952 = vlaneseq
        %v953 = vshrl.u32 %v952, 7
        %v954 = vsub.s32 2, %v953
        %v955 = vrot.slane %v942, %v954
        %v1007 = vunpack.c.l.b16 %v894
        %v1008 = vunpack.c.h.b16 %v894
        %v1009 = vunpack.c.l.b16 %v895
        %v1010 = vunpack.c.l.b16 %v896
        %v1011 = vunpack.c.h.b16 %v896
        %v1012 = vunpack.c.l.b16 %v897
        %v1013 = vunpack.c.l.b16 %v898
        %v1014 = vunpack.c.h.b16 %v898
        %v1015 = vunpack.c.l.b16 %v899
        %v1016 = vunpack.c.l.b16 %v900
        %v1017 = vunpack.c.h.b16 %v900
        %v1018 = vunpack.c.l.b16 %v901
        %v1019 = vunpack.c.l.b16 %v902
        %v1020 = vunpack.c.h.b16 %v902
        %v1021 = vunpack.c.l.b16 %v903
        %v1022 = vunpack.c.l.b16 %v904
        %v1023 = vunpack.c.h.b16 %v904
        %v1024 = vunpack.c.l.b16 %v905
        %v1025 = vunpack.c.l.b16 %v906
        %v1026 = vunpack.c.h.b16 %v906
        %v1027 = vunpack.c.l.b16 %v907
        %v1028 = vunpack.c.l.b16 %v908
        %v1029 = vunpack.c.h.b16 %v908
        %v1030 = vunpack.c.l.b16 %v909
        %v1031 = vunpack.c.l.b16 %v910
        %v1032 = vunpack.c.h.b16 %v910
        %v1033 = vunpack.c.l.b16 %v911
        %v1034 = vunpack.c.l.b16 %v912
        %v1035 = vunpack.c.h.b16 %v912
        %v1036 = vunpack.c.l.b16 %v913
        %v1037 = vunpack.c.l.b16 %v914
        %v1038 = vunpack.c.h.b16 %v914
        %v1039 = vunpack.c.l.b16 %v915
        %v1040 = vunpack.c.l.b16 %v916
        %v1041 = vunpack.c.h.b16 %v916
        %v1042 = vunpack.c.l.b16 %v917
        %v1043 = vunpack.c.l.b16 %v918
        %v1044 = vunpack.c.h.b16 %v918
        %v1045 = vunpack.c.l.b16 %v919
        %v1046 = vunpack.c.l.b16 %v920
        %v1047 = vunpack.c.h.b16 %v920
        %v1048 = vunpack.c.l.b16 %v921
        %v1049 = vunpack.c.l.b16 %v922
        %v1050 = vunpack.c.h.b16 %v922
        %v1051 = vunpack.c.l.b16 %v923
        %v1052 = vunpack.c.l.b16 %v924
        %v1053 = vunpack.c.h.b16 %v924
        %v1054 = vunpack.c.l.b16 %v925
        %v1055 = vunpack.c.l.b16 %v926
        %v1056 = vunpack.c.h.b16 %v926
        %v1057 = vunpack.c.l.b16 %v927
        %v1058 = vunpack.c.l.b16 %v928
        %v1059 = vunpack.c.h.b16 %v928
        %v1060 = vunpack.c.l.b16 %v929
        %v1061 = vunpack.c.l.b16 %v930
        %v1062 = vunpack.c.h.b16 %v930
        %v1063 = vunpack.c.l.b16 %v931
        %v1064 = vunpack.c.l.b16 %v932
        %v1065 = vunpack.c.h.b16 %v932
        %v1066 = vunpack.c.l.b16 %v933
        %v1067 = vunpack.c.l.b16 %v934
        %v1068 = vunpack.c.h.b16 %v934
        %v1069 = vunpack.c.l.b16 %v935
        %v1070 = vunpack.c.l.b16 %v936
        %v1071 = vunpack.c.h.b16 %v936
        %v1072 = vunpack.c.l.b16 %v937
        %v1073 = vunpack.c.l.b16 %v938
        %v1074 = vunpack.c.h.b16 %v938
        %v1075 = vunpack.c.l.b16 %v939
        %v1076 = vunpack.c.l.b16 %v940
        %v1077 = vunpack.c.h.b16 %v940
        %v1078 = vunpack.c.l.b16 %v941
        %v1079 = vpack.c.b16 %v1010, %v1007
        %v1080 = vpack.c.b16 %v1011, %v1008
        %v1081 = vpack.c.b16 %v1012, %v1009
        %v1082 = vpack.c.b16 %v1016, %v1013
        %v1083 = vpack.c.b16 %v1017, %v1014
        %v1084 = vpack.c.b16 %v1018, %v1015
        %v1085 = vpack.c.b16 %v1022, %v1019
        %v1086 = vpack.c.b16 %v1023, %v1020
        %v1087 = vpack.c.b16 %v1024, %v1021
        %v1088 = vpack.c.b16 %v1028, %v1025
        %v1089 = vpack.c.b16 %v1029, %v1026
        %v1090 = vpack.c.b16 %v1030, %v1027
        %v1091 = vpack.c.b16 %v1034, %v1031
        %v1092 = vpack.c.b16 %v1035, %v1032
        %v1093 = vpack.c.b16 %v1036, %v1033
        %v1094 = vpack.c.b16 %v1040, %v1037
        %v1095 = vpack.c.b16 %v1041, %v1038
        %v1096 = vpack.c.b16 %v1042, %v1039
        %v1097 = vpack.c.b16 %v1046, %v1043
        %v1098 = vpack.c.b16 %v1047, %v1044
        %v1099 = vpack.c.b16 %v1048, %v1045
        %v1100 = vpack.c.b16 %v1052, %v1049
        %v1101 = vpack.c.b16 %v1053, %v1050
        %v1102 = vpack.c.b16 %v1054, %v1051
        %v1103 = vpack.c.b16 %v1058, %v1055
        %v1104 = vpack.c.b16 %v1059, %v1056
        %v1105 = vpack.c.b16 %v1060, %v1057
        %v1106 = vpack.c.b16 %v1064, %v1061
        %v1107 = vpack.c.b16 %v1065, %v1062
        %v1108 = vpack.c.b16 %v1066, %v1063
        %v1109 = vpack.c.b16 %v1070, %v1067
        %v1110 = vpack.c.b16 %v1071, %v1068
        %v1111 = vpack.c.b16 %v1072, %v1069
        %v1112 = vpack.c.b16 %v1076, %v1073
        %v1113 = vpack.c.b16 %v1077, %v1074
        %v1114 = vpack.c.b16 %v1078, %v1075
        %v1152 = vsel %vm841, %v893, 0
        %1154 = vmatprep.subr.bf16.mxu0 %v1080
        %1155 = vmatpush1.bf16.msra.mxu0 %v1079
        %1156 = vmatprep.subr.bf16.mxu0 %v1083
        %1157 = vmatpush1.bf16.msra.mxu0 %v1082
        %1158 = vmatprep.subr.bf16.mxu0 %v1086
        %1159 = vmatpush1.bf16.msra.mxu0 %v1085
        %1160 = vmatprep.subr.bf16.mxu0 %v1089
        %1161 = vmatpush1.bf16.msra.mxu0 %v1088
        %1162 = vmatprep.subr.bf16.mxu0 %v1092
        %1163 = vmatpush1.bf16.msra.mxu0 %v1091
        %1164 = vmatprep.subr.bf16.mxu0 %v1095
        %1165 = vmatpush1.bf16.msra.mxu0 %v1094
        %1166 = vmatprep.subr.bf16.mxu0 %v1098
        %1167 = vmatpush1.bf16.msra.mxu0 %v1097
        %1168 = vmatprep.subr.bf16.mxu0 %v1101
        %1169 = vmatpush1.bf16.msra.mxu0 %v1100
        %1170 = vmatprep.subr.bf16.mxu0 %v1104
        %1171 = vmatpush1.bf16.msra.mxu0 %v1103
        %1172 = vmatprep.subr.bf16.mxu0 %v1107
        %1173 = vmatpush1.bf16.msra.mxu0 %v1106
        %1174 = vmatprep.subr.bf16.mxu0 %v1110
        %1175 = vmatpush1.bf16.msra.mxu0 %v1109
        %1176 = vmatprep.subr.bf16.mxu0 %v1113
        %1177 = vmatpush1.bf16.msra.mxu0 %v1112
        %1178 = vmatprep.subr.bf16.mxu0 0
        %1179 = vmatpush1.bf16.msra.mxu0 0
        %1180 = vmatprep.subr.bf16.mxu0 0
        %1181 = vmatpush1.bf16.msra.mxu0 0
        %1182 = vmatprep.subr.bf16.mxu0 0
        %1183 = vmatpush1.bf16.msra.mxu0 0
        %1184 = vmatprep.subr.bf16.mxu0 0
        %1185 = vmatpush1.bf16.msra.mxu0 0
        %1186 = vmatprep.mubr.bf16.mxu0 %v1152
        %1187 = vmatmul.mubr.bf16.gmra.mrb[0].mxu0 %v892
        %v1188 = vpop.f32.mrb[0].mxu0
        %v1189 = vadd.f32 %v947, %v1188
        %v1190 = vpop.f32.mrb[0].mxu0
        %v1191 = vadd.f32 %v951, %v1190
        %v1192 = vpop.f32.mrb[0].mxu0
        %v1193 = vadd.f32 %v947, %v1192
        %v1194 = vpop.f32.mrb[0].mxu0
        %v1195 = vadd.f32 %v951, %v1194
        %1196 = vdwg.mxu0
        %1197 = vmatprep.subr.bf16.mxu0 0
        %1198 = vmatpush1.bf16.msra.mxu0 %v1081
        %1199 = vmatprep.subr.bf16.mxu0 0
        %1200 = vmatpush1.bf16.msra.mxu0 %v1084
        %1201 = vmatprep.subr.bf16.mxu0 0
        %1202 = vmatpush1.bf16.msra.mxu0 %v1087
        %1203 = vmatprep.subr.bf16.mxu0 0
        %1204 = vmatpush1.bf16.msra.mxu0 %v1090
        %1205 = vmatprep.subr.bf16.mxu0 0
        %1206 = vmatpush1.bf16.msra.mxu0 %v1093
        %1207 = vmatprep.subr.bf16.mxu0 0
        %1208 = vmatpush1.bf16.msra.mxu0 %v1096
        %1209 = vmatprep.subr.bf16.mxu0 0
        %1210 = vmatpush1.bf16.msra.mxu0 %v1099
        %1211 = vmatprep.subr.bf16.mxu0 0
        %1212 = vmatpush1.bf16.msra.mxu0 %v1102
        %1213 = vmatprep.subr.bf16.mxu0 0
        %1214 = vmatpush1.bf16.msra.mxu0 %v1105
        %1215 = vmatprep.subr.bf16.mxu0 0
        %1216 = vmatpush1.bf16.msra.mxu0 %v1108
        %1217 = vmatprep.subr.bf16.mxu0 0
        %1218 = vmatpush1.bf16.msra.mxu0 %v1111
        %1219 = vmatprep.subr.bf16.mxu0 0
        %1220 = vmatpush1.bf16.msra.mxu0 %v1114
        %1221 = vmatprep.subr.bf16.mxu0 0
        %1222 = vmatpush1.bf16.msra.mxu0 0
        %1223 = vmatprep.subr.bf16.mxu0 0
        %1224 = vmatpush1.bf16.msra.mxu0 0
        %1225 = vmatprep.subr.bf16.mxu0 0
        %1226 = vmatpush1.bf16.msra.mxu0 0
        %1227 = vmatprep.subr.bf16.mxu0 0
        %1228 = vmatpush1.bf16.msra.mxu0 0
        %1229 = vmatprep.mubr.bf16.mxu0 %v1152
        %1230 = vmatmul.mubr.bf16.gmra.mrb[0].mxu0 %v892
        %v1231 = vpop.f32.mrb[0].mxu0
        %v1232 = vadd.f32 %v955, %v1231
        %v1233 = vpop.f32.mrb[0].mxu0
        %v1234 = vpop.f32.mrb[0].mxu0
        %v1235 = vadd.f32 %v955, %v1234
        %v1236 = vpop.f32.mrb[0].mxu0
        %1237 = vdwg.mxu0
        %1238 = vst [vmem:[%s274] sm:$0xff] %v1189
        %1239 = vst [vmem:[%s274 + $0x8] sm:$0xff] %v1191
        %1240 = vst [vmem:[%s274 + $0x10] sm:$0xff] %v1232
        %1241 = vst [vmem:[%s274 + $0x18] sm:$0xff] %v1193
        %1242 = vst [vmem:[%s274 + $0x20] sm:$0xff] %v1195
        %1243 = vst [vmem:[%s274 + $0x28] sm:$0xff] %v1235
        %s1244 = sand.u32 %s181, 1
        %s1245 = scalar_lea.sflag [#allocation3], %s1244
        %s1246 = sand.u32 %s181, 1
        %s1247 = smul.addr %s1246, 48
        %s1248 = scalar_lea.vmem [#allocation2], %s1247
        // Predicated region
        $region49: #{tpu_custom_call.1} parent=47 // pred_check
          %p1249 = pneg %p191
        $region50: #{tpu_custom_call.1} parent=47 // pred_check_branch
          %1251 = sbr.rel (%p1249) target = $region52
        $region51: #{tpu_custom_call.1} parent=47 // pred_region
          %s1252 = smul.u32 2, %s21
          %s1254 = ssub.s32 768, 768
          %1255 = vsyncadd %s1245, %s1254
          %s1256 = smul.addr %s1252, 3
          %s1257 = smul.addr %s1256, 128
          %s1258 = scalar_lea.hbm %s7, %s1257
          %s1259 = sshll.u32 %s1248, 4
          %s1260 = int_to_ptr.vmem [resolvable:$true] %s1259
          %1265 = dma.vmem_to_hbm [thread:$0]  %s1260, 768, %s1258, %s1245, 384, 384, 24
        $region52: #{tpu_custom_call.1} parent=47 // pred_fallthru
          _
      $region48: #{tpu_custom_call.1} parent=5 // pred_fallthru
        _
      %p1266 = scmp.le.s32.totalorder 2, %s16
      // Predicated region
      $region53: #{tpu_custom_call.1} parent=5 // pred_check
        %p1267 = pneg %p1266
      $region54: #{tpu_custom_call.1} parent=5 // pred_check_branch
        %1269 = sbr.rel (%p1267) target = $region56
      $region55: #{tpu_custom_call.1} parent=5 // pred_region
        %s1270 = ssub.s32 %s16, 2
        // Predicated region
        $region57: #{tpu_custom_call.1} parent=55 // pred_check
          %p1271 = pneg %p197
        $region58: #{tpu_custom_call.1} parent=55 // pred_check_branch
          %1273 = sbr.rel (%p1271) target = $region60
        $region59: #{tpu_custom_call.1} parent=55 // pred_region
          %s1274 = sand.u32 %s182, 1
          %s1275 = scalar_lea.sflag [#allocation3], %s1274
          %s1276 = sand.u32 %s182, 1
          %s1277 = smul.addr %s1276, 48
          %s1278 = scalar_lea.vmem [#allocation2], %s1277
          %1279 = dma.done %s1275, 768
        $region60: #{tpu_custom_call.1} parent=55 // pred_fallthru
          _
      $region56: #{tpu_custom_call.1} parent=5 // pred_fallthru
        _
    $region6: #{tpu_custom_call.1} parent=1 // loop_footer
      %s20 = sadd.s32 1, %s16
    $region7: #{tpu_custom_call.1} parent=1 // loop_footer_branch
      %15 = sbr.rel target = $region3
    $region8: #{tpu_custom_call.1} parent=1 // loop_exit
      _
    %1280 = vsyncpa [#allocation3], 1
    %s1281 = scalar_lea.sflag [#allocation3], 1
    %1282 = vsyncpa %s1281, 1

</llo_original>
